<compile_context>
chip_gen: v7x
topology: tpu7x:2x2x1
jax: 0.10.0
libtpu: 0.0.40
codegen_flags: <defaults>
</compile_context>

<pallas_src>
import jax
import jax.numpy as jnp
from jax.experimental import pallas as pl
from jax.experimental.pallas import tpu as pltpu

LANE = 128
SUBLANE = 8
GRANULE = SUBLANE * LANE  # 1024 lanes: smallest (8,128)-aligned tile
# 65536 lanes = 512 rows x 128 lanes per grid step.  Double-buffered VMEM for
# the 3-input disp path: 3 inputs * 2 bufs * (3*512*128*4 B) + output
# 2 * (4*512*128*4 B) ~= 6.7 MiB -> fits every generation's default scoped
# VMEM limit.  On v7x (~3.2 TB/s HBM) this can be raised toward 131072 for
# very large E; on v5e 32-64K lanes is already < 10% per-step overhead.
DEFAULT_TILE = 65536


def _pairdist_kernel_disp(src_ref, dst_ref, disp_ref, out_ref):
    # blocks: src/dst/disp (3, R, 128); out (4, R, 128): rows 0-2 diff, row 3 dist
    d0 = (dst_ref[0] - src_ref[0]) + disp_ref[0]
    d1 = (dst_ref[1] - src_ref[1]) + disp_ref[1]
    d2 = (dst_ref[2] - src_ref[2]) + disp_ref[2]
    out_ref[0] = d0
    out_ref[1] = d1
    out_ref[2] = d2
    out_ref[3] = jnp.sqrt(d0 * d0 + d1 * d1 + d2 * d2)


def _pairdist_kernel_nodisp(src_ref, dst_ref, out_ref):
    d0 = dst_ref[0] - src_ref[0]
    d1 = dst_ref[1] - src_ref[1]
    d2 = dst_ref[2] - src_ref[2]
    out_ref[0] = d0
    out_ref[1] = d1
    out_ref[2] = d2
    out_ref[3] = jnp.sqrt(d0 * d0 + d1 * d1 + d2 * d2)


def _tile_and_pad(n_edges, max_tile):
    """Balanced, (8,128)-granule tile (in lanes) and padded edge count."""
    max_tile = max(GRANULE, (int(max_tile) // GRANULE) * GRANULE)
    # Minimum number of grid steps at max_tile lanes per step.
    n_steps = pl.cdiv(n_edges, max_tile)
    # Force >= 2 steps when the problem is big enough to split, so the
    # "parallel" grid axis can shard across v7x's two TensorCores.
    if n_steps < 2 and n_edges > 2 * GRANULE:
        n_steps = 2
    n_steps = max(n_steps, 1)
    # Balanced tile: the last block carries < GRANULE lanes of padding.
    tile = pl.cdiv(pl.cdiv(n_edges, n_steps), GRANULE) * GRANULE
    e_pad = tile * pl.cdiv(n_edges, tile)
    return tile, e_pad


def pairwise_distance(pos, edge_idx, cell_displacements=None, *, tile=None):
    """pos: (N, 3) float; edge_idx: (E, 2) int; cell_displacements: (E, 3) or None.
    Returns (edge_diff (E, 3) float32, edge_dist (E,) float32)."""
    E = edge_idx.shape[0]
    if E == 0:
        return jnp.zeros((0, 3), jnp.float32), jnp.zeros((0,), jnp.float32)

    tile, e_pad = _tile_and_pad(E, DEFAULT_TILE if tile is None else tile)
    pad = e_pad - E
    rows = e_pad // LANE
    r_blk = tile // LANE  # multiple of 8 -> (8,128)-aligned block
    grid = (e_pad // tile,)

    # Gather endpoints in coordinate-major (3, E) layout, pad, and fold the
    # edge axis into (rows, 128).  NOTE: pallas_call is a custom call, so the
    # gathered (3, e_pad) operands ARE materialized in HBM by XLA first.
    # TODO(synk): stream edge_idx into the kernel and gather from a
    # VMEM-resident pos (scalar-prefetch / jnp.take on a VMEM ref) to cut input
    # traffic to ~8 B/edge; needs pos to fit in VMEM and a check that the TPU
    # lane-gather lowers cleanly, so it is left as wrapper-side gather here.
    pos_t = pos.astype(jnp.float32).T                               # (3, N)
    src_t = jnp.pad(pos_t[:, edge_idx[:, 0]], ((0, 0), (0, pad)))   # (3, e_pad)
    dst_t = jnp.pad(pos_t[:, edge_idx[:, 1]], ((0, 0), (0, pad)))   # (3, e_pad)
    src_t = src_t.reshape(3, rows, LANE)
    dst_t = dst_t.reshape(3, rows, LANE)

    in_spec = pl.BlockSpec((3, r_blk, LANE), lambda i: (0, i, 0))
    out_spec = pl.BlockSpec((4, r_blk, LANE), lambda i: (0, i, 0))
    out_shape = jax.ShapeDtypeStruct((4, rows, LANE), jnp.float32)
    compiler_params = pltpu.CompilerParams(dimension_semantics=("parallel",))

    if cell_displacements is None:
        # Specialized 2-input kernel: no zero-displacement stream through HBM.
        out = pl.pallas_call(
            _pairdist_kernel_nodisp,
            out_shape=out_shape,
            grid_spec=pltpu.PrefetchScalarGridSpec(
                num_scalar_prefetch=0,
                grid=grid,
                in_specs=[in_spec, in_spec],
                out_specs=out_spec,
            ),
            compiler_params=compiler_params,
        )(src_t, dst_t)
    else:
        disp_t = jnp.pad(cell_displacements.astype(jnp.float32).T,
                         ((0, 0), (0, pad))).reshape(3, rows, LANE)
        out = pl.pallas_call(
            _pairdist_kernel_disp,
            out_shape=out_shape,
            grid_spec=pltpu.PrefetchScalarGridSpec(
                num_scalar_prefetch=0,
                grid=grid,
                in_specs=[in_spec, in_spec, in_spec],
                out_specs=out_spec,
            ),
            compiler_params=compiler_params,
        )(src_t, dst_t, disp_t)

    out_flat = out.reshape(4, e_pad)
    # Back-transpose only the live :E slice to match the PyTorch (E, 3) layout.
    # If the downstream consumer accepts coordinate-major (3, E) diff, return
    # out_flat[:3, :E] directly and skip this extra HBM pass.
    edge_diff = out_flat[:3, :E].T    # (E, 3)
    edge_dist = out_flat[3, :E]       # (E,)
    # TODO(synk): pallas_call is not differentiable by default; force
    # computation (compute_forces=True / requires_grad_) needs a custom_vjp
    # (and an eps in sqrt, whose gradient is NaN at 0 for self-edges).
    return edge_diff, edge_dist


if __name__ == "__main__":
    key = jax.random.PRNGKey(0)
    k_pos, k_edge, k_cell = jax.random.split(key, 3)

    n_atoms = 16
    n_edges = 64

    pos = jax.random.normal(k_pos, (n_atoms, 3), dtype=jnp.float32) * 2.0
    edge_idx = jax.random.randint(k_edge, (n_edges, 2), 0, n_atoms, dtype=jnp.int32)
    cell_disp = jax.random.normal(k_cell, (n_edges, 3), dtype=jnp.float32) * 0.1

    # Path with cell displacements (PBC offsets).
    edge_diff, edge_dist = jax.jit(pairwise_distance)(pos, edge_idx, cell_disp)
    jax.block_until_ready((edge_diff, edge_dist))

    ref_diff = pos[edge_idx[:, 1]] - pos[edge_idx[:, 0]] + cell_disp
    ref_dist = jnp.linalg.norm(ref_diff, axis=1)

    assert edge_diff.shape == (n_edges, 3)
    assert edge_dist.shape == (n_edges,)
    assert jnp.allclose(edge_diff, ref_diff, atol=1e-5, rtol=1e-5)
    assert jnp.allclose(edge_dist, ref_dist, atol=1e-5, rtol=1e-5)

    # Specialized path without cell displacements (no zero stream).
    edge_diff2, edge_dist2 = jax.jit(
        lambda p, e: pairwise_distance(p, e, None))(pos, edge_idx)
    jax.block_until_ready((edge_diff2, edge_dist2))

    ref_diff2 = pos[edge_idx[:, 1]] - pos[edge_idx[:, 0]]
    ref_dist2 = jnp.linalg.norm(ref_diff2, axis=1)

    assert jnp.allclose(edge_diff2, ref_diff2, atol=1e-5, rtol=1e-5)
    assert jnp.allclose(edge_dist2, ref_dist2, atol=1e-5, rtol=1e-5)

    # TODO(synk): BatchNeighborList (compute_neighbor_list=True) and autograd
    # force bookkeeping (requires_grad_) have no Pallas equivalent; only the
    # distance computation is kernelized.
    print("KERNEL_OK")
</pallas_src>

<mosaic_0001>
module attributes {stable_mosaic.version = 11 : i64} {
  func.func @_pairdist_kernel_disp(%arg0: i32, %arg1: memref<3x8x128xf32, #tpu.memory_space<vmem>>, %arg2: memref<3x8x128xf32, #tpu.memory_space<vmem>>, %arg3: memref<3x8x128xf32, #tpu.memory_space<vmem>>, %arg4: memref<4x8x128xf32, #tpu.memory_space<vmem>>) attributes {dimension_semantics = [#tpu.dimension_semantics<parallel>], iteration_bounds = array<i64: 1>, scalar_prefetch = 0 : i64, scratch_operands = 0 : i64, tpu.core_type = #tpu.core_type<tc>, window_params = [{transform_indices = @transform_0, window_bounds = array<i64: 3, 8, 128>}, {transform_indices = @transform_1, window_bounds = array<i64: 3, 8, 128>}, {transform_indices = @transform_2, window_bounds = array<i64: 3, 8, 128>}, {transform_indices = @transform_3, window_bounds = array<i64: 4, 8, 128>}]} {
    %c0 = arith.constant 0 : index
    %c0_0 = arith.constant 0 : index
    %c0_1 = arith.constant 0 : index
    %0 = vector.load %arg2[%c0, %c0_0, %c0_1] : memref<3x8x128xf32, #tpu.memory_space<vmem>>, vector<1x8x128xf32>
    %1 = vector.shape_cast %0 : vector<1x8x128xf32> to vector<8x128xf32>
    %c0_2 = arith.constant 0 : index
    %c0_3 = arith.constant 0 : index
    %c0_4 = arith.constant 0 : index
    %2 = vector.load %arg1[%c0_2, %c0_3, %c0_4] : memref<3x8x128xf32, #tpu.memory_space<vmem>>, vector<1x8x128xf32>
    %3 = vector.shape_cast %2 : vector<1x8x128xf32> to vector<8x128xf32>
    %4 = arith.subf %1, %3 : vector<8x128xf32>
    %c0_5 = arith.constant 0 : index
    %c0_6 = arith.constant 0 : index
    %c0_7 = arith.constant 0 : index
    %5 = vector.load %arg3[%c0_5, %c0_6, %c0_7] : memref<3x8x128xf32, #tpu.memory_space<vmem>>, vector<1x8x128xf32>
    %6 = vector.shape_cast %5 : vector<1x8x128xf32> to vector<8x128xf32>
    %7 = arith.addf %4, %6 : vector<8x128xf32>
    %c1 = arith.constant 1 : index
    %c0_8 = arith.constant 0 : index
    %c0_9 = arith.constant 0 : index
    %8 = vector.load %arg2[%c1, %c0_8, %c0_9] : memref<3x8x128xf32, #tpu.memory_space<vmem>>, vector<1x8x128xf32>
    %9 = vector.shape_cast %8 : vector<1x8x128xf32> to vector<8x128xf32>
    %c1_10 = arith.constant 1 : index
    %c0_11 = arith.constant 0 : index
    %c0_12 = arith.constant 0 : index
    %10 = vector.load %arg1[%c1_10, %c0_11, %c0_12] : memref<3x8x128xf32, #tpu.memory_space<vmem>>, vector<1x8x128xf32>
    %11 = vector.shape_cast %10 : vector<1x8x128xf32> to vector<8x128xf32>
    %12 = arith.subf %9, %11 : vector<8x128xf32>
    %c1_13 = arith.constant 1 : index
    %c0_14 = arith.constant 0 : index
    %c0_15 = arith.constant 0 : index
    %13 = vector.load %arg3[%c1_13, %c0_14, %c0_15] : memref<3x8x128xf32, #tpu.memory_space<vmem>>, vector<1x8x128xf32>
    %14 = vector.shape_cast %13 : vector<1x8x128xf32> to vector<8x128xf32>
    %15 = arith.addf %12, %14 : vector<8x128xf32>
    %c2 = arith.constant 2 : index
    %c0_16 = arith.constant 0 : index
    %c0_17 = arith.constant 0 : index
    %16 = vector.load %arg2[%c2, %c0_16, %c0_17] : memref<3x8x128xf32, #tpu.memory_space<vmem>>, vector<1x8x128xf32>
    %17 = vector.shape_cast %16 : vector<1x8x128xf32> to vector<8x128xf32>
    %c2_18 = arith.constant 2 : index
    %c0_19 = arith.constant 0 : index
    %c0_20 = arith.constant 0 : index
    %18 = vector.load %arg1[%c2_18, %c0_19, %c0_20] : memref<3x8x128xf32, #tpu.memory_space<vmem>>, vector<1x8x128xf32>
    %19 = vector.shape_cast %18 : vector<1x8x128xf32> to vector<8x128xf32>
    %20 = arith.subf %17, %19 : vector<8x128xf32>
    %c2_21 = arith.constant 2 : index
    %c0_22 = arith.constant 0 : index
    %c0_23 = arith.constant 0 : index
    %21 = vector.load %arg3[%c2_21, %c0_22, %c0_23] : memref<3x8x128xf32, #tpu.memory_space<vmem>>, vector<1x8x128xf32>
    %22 = vector.shape_cast %21 : vector<1x8x128xf32> to vector<8x128xf32>
    %23 = arith.addf %20, %22 : vector<8x128xf32>
    %c0_24 = arith.constant 0 : index
    %c0_25 = arith.constant 0 : index
    %c0_26 = arith.constant 0 : index
    %24 = vector.load %arg4[%c0_24, %c0_25, %c0_26] : memref<4x8x128xf32, #tpu.memory_space<vmem>>, vector<1x8x128xf32>
    %25 = vector.shape_cast %24 : vector<1x8x128xf32> to vector<8x128xf32>
    %26 = vector.shape_cast %7 : vector<8x128xf32> to vector<1x8x128xf32>
    tpu.vector_store %arg4[%c0_24, %c0_25, %c0_26], %26 {strides = array<i32>} : memref<4x8x128xf32, #tpu.memory_space<vmem>>, vector<1x8x128xf32>,
    %c1_27 = arith.constant 1 : index
    %c0_28 = arith.constant 0 : index
    %c0_29 = arith.constant 0 : index
    %27 = vector.load %arg4[%c1_27, %c0_28, %c0_29] : memref<4x8x128xf32, #tpu.memory_space<vmem>>, vector<1x8x128xf32>
    %28 = vector.shape_cast %27 : vector<1x8x128xf32> to vector<8x128xf32>
    %29 = vector.shape_cast %15 : vector<8x128xf32> to vector<1x8x128xf32>
    tpu.vector_store %arg4[%c1_27, %c0_28, %c0_29], %29 {strides = array<i32>} : memref<4x8x128xf32, #tpu.memory_space<vmem>>, vector<1x8x128xf32>,
    %c2_30 = arith.constant 2 : index
    %c0_31 = arith.constant 0 : index
    %c0_32 = arith.constant 0 : index
    %30 = vector.load %arg4[%c2_30, %c0_31, %c0_32] : memref<4x8x128xf32, #tpu.memory_space<vmem>>, vector<1x8x128xf32>
    %31 = vector.shape_cast %30 : vector<1x8x128xf32> to vector<8x128xf32>
    %32 = vector.shape_cast %23 : vector<8x128xf32> to vector<1x8x128xf32>
    tpu.vector_store %arg4[%c2_30, %c0_31, %c0_32], %32 {strides = array<i32>} : memref<4x8x128xf32, #tpu.memory_space<vmem>>, vector<1x8x128xf32>,
    %33 = arith.mulf %7, %7 : vector<8x128xf32>
    %34 = arith.mulf %15, %15 : vector<8x128xf32>
    %35 = arith.addf %33, %34 : vector<8x128xf32>
    %36 = arith.mulf %23, %23 : vector<8x128xf32>
    %37 = arith.addf %35, %36 : vector<8x128xf32>
    %38 = math.sqrt %37 : vector<8x128xf32>
    %c3 = arith.constant 3 : index
    %c0_33 = arith.constant 0 : index
    %c0_34 = arith.constant 0 : index
    %39 = vector.load %arg4[%c3, %c0_33, %c0_34] : memref<4x8x128xf32, #tpu.memory_space<vmem>>, vector<1x8x128xf32>
    %40 = vector.shape_cast %39 : vector<1x8x128xf32> to vector<8x128xf32>
    %41 = vector.shape_cast %38 : vector<8x128xf32> to vector<1x8x128xf32>
    tpu.vector_store %arg4[%c3, %c0_33, %c0_34], %41 {strides = array<i32>} : memref<4x8x128xf32, #tpu.memory_space<vmem>>, vector<1x8x128xf32>,
    return
  }
  func.func @transform_0(%arg0: i32) -> (i32, i32, i32) {
    %c0_i32 = arith.constant 0 : i32
    %c0_i32_0 = arith.constant 0 : i32
    %c0_i32_1 = arith.constant 0 : i32
    return %c0_i32, %arg0, %c0_i32_0 : i32, i32, i32
  }
  func.func @transform_1(%arg0: i32) -> (i32, i32, i32) {
    %c0_i32 = arith.constant 0 : i32
    %c0_i32_0 = arith.constant 0 : i32
    %c0_i32_1 = arith.constant 0 : i32
    return %c0_i32, %arg0, %c0_i32_0 : i32, i32, i32
  }
  func.func @transform_2(%arg0: i32) -> (i32, i32, i32) {
    %c0_i32 = arith.constant 0 : i32
    %c0_i32_0 = arith.constant 0 : i32
    %c0_i32_1 = arith.constant 0 : i32
    return %c0_i32, %arg0, %c0_i32_0 : i32, i32, i32
  }
  func.func @transform_3(%arg0: i32) -> (i32, i32, i32) {
    %c0_i32 = arith.constant 0 : i32
    %c0_i32_0 = arith.constant 0 : i32
    %c0_i32_1 = arith.constant 0 : i32
    return %c0_i32, %arg0, %c0_i32_0 : i32, i32, i32
  }
}

</mosaic_0001>

<llo_original>
// kernel: pairwise_distance.1
$region0: #{pairwise_distance.1}
  #allocation0 [shape = 'u32[]', space=smem, size = 0x4, offset = 0x4, fixed_abs, tag = 'smem constant byte address 0x4 - core index']
  #allocation1 [shape = 'u32[144,128]{1,0:T(1,128)}', space=vmem, size = 0x12000, scoped, tag = 'internal scratch']
  %s0 = inlined_call_operand.vmem [shape: f32[3,8,128], index: 0, kind: input, shape index: {}]
  %s1 = inlined_call_operand.vmem [shape: f32[3,8,128], index: 1, kind: input, shape index: {}]
  %s2 = inlined_call_operand.vmem [shape: f32[3,8,128], index: 2, kind: input, shape index: {}]
  %s3 = inlined_call_operand.vmem [shape: f32[4,8,128], index: 3, kind: output, shape index: {}]
  %s4 = sld [smem:[#allocation0]]
  $region22: #{pairwise_distance.1} parent=0
    _
  %s6 = ssub.s32 1, %s4
  %s7 = scalar_select 0, %s6, %s4
  // Predicated region
  $region2: #{pairwise_distance.1} parent=0 // pred_check
    _
  $region3: #{pairwise_distance.1} parent=0 // pred_check_branch
    %9 = sbr.rel (0) target = $region5
  $region4: #{pairwise_distance.1} parent=0 // pred_region
    _
  $region5: #{pairwise_distance.1} parent=0 // pred_fallthru
    _
  // Predicated region
  $region6: #{pairwise_distance.1} parent=0 // pred_check
    _
  $region7: #{pairwise_distance.1} parent=0 // pred_check_branch
    %11 = sbr.rel (0) target = $region9
  $region8: #{pairwise_distance.1} parent=0 // pred_region
    _
  $region9: #{pairwise_distance.1} parent=0 // pred_fallthru
    _
  // Predicated region
  $region10: #{pairwise_distance.1} parent=0 // pred_check
    _
  $region11: #{pairwise_distance.1} parent=0 // pred_check_branch
    %13 = sbr.rel (0) target = $region13
  $region12: #{pairwise_distance.1} parent=0 // pred_region
    _
  $region13: #{pairwise_distance.1} parent=0 // pred_fallthru
    _
  %v14 = vld [vmem:[%s1] sm:$0xff]
  %v15 = vld [vmem:[%s0] sm:$0xff]
  %v16 = vsub.f32 %v14, %v15
  %v17 = vld [vmem:[%s2] sm:$0xff]
  %v18 = vadd.f32 %v16, %v17
  %s19 = scalar_lea.vmem %s1, 8
  %v20 = vld [vmem:[%s19] sm:$0xff]
  %s21 = scalar_lea.vmem %s0, 8
  %v22 = vld [vmem:[%s21] sm:$0xff]
  %v23 = vsub.f32 %v20, %v22
  %s24 = scalar_lea.vmem %s2, 8
  %v25 = vld [vmem:[%s24] sm:$0xff]
  %v26 = vadd.f32 %v23, %v25
  %s27 = scalar_lea.vmem %s1, 16
  %v28 = vld [vmem:[%s27] sm:$0xff]
  %s29 = scalar_lea.vmem %s0, 16
  %v30 = vld [vmem:[%s29] sm:$0xff]
  %v31 = vsub.f32 %v28, %v30
  %s32 = scalar_lea.vmem %s2, 16
  %v33 = vld [vmem:[%s32] sm:$0xff]
  %v34 = vadd.f32 %v31, %v33
  %35 = vst [vmem:[%s3] sm:$0xff] %v18
  %s36 = scalar_lea.vmem %s3, 8
  %37 = vst [vmem:[%s36] sm:$0xff] %v26
  %s38 = scalar_lea.vmem %s3, 16
  %39 = vst [vmem:[%s38] sm:$0xff] %v34
  %v40 = vmul.f32 %v18, %v18
  %v41 = vmul.f32 %v26, %v26
  %v42 = vadd.f32 %v40, %v41
  %v43 = vmul.f32 %v34, %v34
  %v44 = vadd.f32 %v42, %v43
  %v45 = vrsqrt.pop %v44
  %v46 = vmul.f32 %v44, %v45
  %vm47 = vcmp.eq.f32.partialorder %v44, inf
  %v48 = vsel %vm47, %v44, %v46
  %vm49 = vcmp.eq.f32.partialorder %v44, 0.0
  %v50 = vand.u32 %v44, 2147483648
  %v51 = vsel %vm49, %v50, %v48
  %s52 = scalar_lea.vmem %s3, 24
  %53 = vst [vmem:[%s52] sm:$0xff] %v51
  // Predicated region
  $region14: #{pairwise_distance.1} parent=0 // pred_check
    _
  $region15: #{pairwise_distance.1} parent=0 // pred_check_branch
    %55 = sbr.rel (0) target = $region17
  $region16: #{pairwise_distance.1} parent=0 // pred_region
    _
  $region17: #{pairwise_distance.1} parent=0 // pred_fallthru
    _
  // Predicated region
  $region18: #{pairwise_distance.1} parent=0 // pred_check
    _
  $region19: #{pairwise_distance.1} parent=0 // pred_check_branch
    %57 = sbr.rel (0) target = $region21
  $region20: #{pairwise_distance.1} parent=0 // pred_region
    _
  $region21: #{pairwise_distance.1} parent=0 // pred_fallthru
    _

</llo_original>
